<compile_context>
chip_gen: v6e
topology: v6e:2x2x1
jax: 0.10.0
libtpu: 0.0.40
codegen_flags: <defaults>
</compile_context>

<pallas_src>
import jax
import jax.numpy as jnp
from jax.experimental import pallas as pl
from jax.experimental.pallas import tpu as pltpu

ACTIVATION = "silu"   # DimeNet uses swish/SiLU; set to None for bare 2-linear residual

LANE = 128
SUBLANE = 8


def _act(v):
    if ACTIVATION == "silu":
        return v * jax.nn.sigmoid(v)   # sigmoid goes to the EUP slot (cheap)
    return v


def _round_up(x, m):
    return (x + m - 1) // m * m


def residual_layer_kernel(x_ref, w1t_ref, b1_ref, w2t_ref, b2_ref, o_ref):
    x = x_ref[...]

    # linear_1: x @ W1^T + b1   (MXU, f32 accumulation)
    h = jnp.dot(x, w1t_ref[...], preferred_element_type=jnp.float32)
    h = _act(h + b1_ref[...].astype(jnp.float32))

    # linear_2: h @ W2^T + b2
    h = jnp.dot(h.astype(w2t_ref.dtype), w2t_ref[...],
                preferred_element_type=jnp.float32)
    h = _act(h + b2_ref[...].astype(jnp.float32))

    # Residual: re-read x from VMEM here (keeps vreg pressure low across the
    # two matmuls), do the add in f32, cast once on store.
    o_ref[...] = (x_ref[...].astype(jnp.float32) + h).astype(o_ref.dtype)


def prepare_params(w1, b1, w2, b2):
    """Transpose PyTorch (out,in) weights to (in,out) and zero-pad the feature
    dim up to a multiple of 128 (lane-dense). Call once per parameter set,
    OUTSIDE the per-step jit, so no per-call transpose/pad hits HBM."""
    d = w1.shape[0]
    dp = max(_round_up(d, LANE), LANE)
    pad = dp - d
    w1t = jnp.pad(jnp.transpose(w1), ((0, pad), (0, pad)))
    w2t = jnp.pad(jnp.transpose(w2), ((0, pad), (0, pad)))
    b1p = jnp.pad(b1, (0, pad)).reshape(1, dp)
    b2p = jnp.pad(b2, (0, pad)).reshape(1, dp)
    return w1t, b1p, w2t, b2p


def _pick_tile_n(n_hint, d_pad, itemsize):
    # ~40 MiB working budget (safe under v5e/v6e/v7x scoped limits we request);
    # weights are double-buffered by the pipeline, x/out tiles are 2x2 buffered.
    vmem_budget = 40 * 1024 * 1024
    weight_bytes = 2 * (2 * d_pad * d_pad + 2 * d_pad) * itemsize
    stream_budget = max(vmem_budget - weight_bytes, 2 * 1024 * 1024)
    per_row = 4 * d_pad * itemsize            # (x + out) x double-buffer
    t = max(SUBLANE, min(stream_budget // per_row, 1024, n_hint))
    return int(t // SUBLANE * SUBLANE)


@jax.jit
def residual_layer(x, w1t, b1, w2t, b2):
    """x: [N, D]; w1t/w2t: [Dp, Dp] padded (in,out); b1/b2: [1, Dp] padded."""
    n, d = x.shape
    dp = w1t.shape[0]
    itemsize = jnp.dtype(x.dtype).itemsize

    n_hint = _round_up(max(n, SUBLANE), SUBLANE)
    tile_n = _pick_tile_n(n_hint, dp, itemsize)
    n_pad = _round_up(n_hint, tile_n)

    x_pad = jnp.pad(x, ((0, n_pad - n), (0, dp - d)))

    grid = (n_pad // tile_n,)

    flops = 4 * n_pad * dp * dp                       # two matmuls
    transcendentals = (2 * n_pad * dp) if ACTIVATION == "silu" else 0
    bytes_accessed = (2 * n_pad * dp + 2 * dp * dp + 2 * dp) * itemsize

    out_pad = pl.pallas_call(
        residual_layer_kernel,
        out_shape=jax.ShapeDtypeStruct((n_pad, dp), x.dtype),
        grid_spec=pltpu.PrefetchScalarGridSpec(
            num_scalar_prefetch=0,
            grid=grid,
            in_specs=[
                pl.BlockSpec((tile_n, dp), lambda i: (i, 0)),  # x: streamed
                pl.BlockSpec((dp, dp), lambda i: (0, 0)),      # W1^T: resident
                pl.BlockSpec((1, dp), lambda i: (0, 0)),       # b1
                pl.BlockSpec((dp, dp), lambda i: (0, 0)),      # W2^T: resident
                pl.BlockSpec((1, dp), lambda i: (0, 0)),       # b2
            ],
            out_specs=pl.BlockSpec((tile_n, dp), lambda i: (i, 0)),
        ),
        compiler_params=pltpu.CompilerParams(
            dimension_semantics=("parallel",),
            vmem_limit_bytes=48 * 1024 * 1024,
        ),
        cost_estimate=pl.CostEstimate(
            flops=flops,
            transcendentals=transcendentals,
            bytes_accessed=bytes_accessed,
        ),
        input_output_aliases={0: 0},   # output reuses x_pad's HBM buffer
    )(x_pad, w1t, b1, w2t, b2)

    return out_pad[:n, :d]


def residual_layer_ref(x, w1, b1, w2, b2):
    h = x @ w1.T + b1
    h = _act(h)
    h = h @ w2.T + b2
    h = _act(h)
    return x + h


if __name__ == "__main__":
    N, D = 8, 32  # small shapes consistent with a [batch, in_dim] input

    key = jax.random.PRNGKey(0)
    kx, kw1, kw2 = jax.random.split(key, 3)

    x = jax.random.normal(kx, (N, D), dtype=jnp.float32)
    # nn.Linear(in_dim, in_dim) parameter shapes, PyTorch (out, in) layout.
    w1 = jax.random.normal(kw1, (D, D), dtype=jnp.float32) * 0.1
    b1 = jnp.zeros((D,), dtype=jnp.float32)
    w2 = jax.random.normal(kw2, (D, D), dtype=jnp.float32) * 0.1
    b2 = jnp.zeros((D,), dtype=jnp.float32)

    # One-time parameter prep (transpose + lane padding), outside the hot path.
    w1t, b1p, w2t, b2p = prepare_params(w1, b1, w2, b2)

    out = residual_layer(x, w1t, b1p, w2t, b2p)
    out = jax.block_until_ready(out)

    ref = residual_layer_ref(x, w1, b1, w2, b2)
    assert out.shape == (N, D) and out.dtype == x.dtype
    assert jnp.allclose(out, ref, atol=1e-5, rtol=1e-5), "mismatch vs reference"

    print("KERNEL_OK")
</pallas_src>

<mosaic_0001>
module attributes {stable_mosaic.version = 11 : i64} {
  func.func @residual_layer_kernel(%arg0: i32, %arg1: memref<8x128xf32, #tpu.memory_space<vmem>>, %arg2: memref<128x128xf32, #tpu.memory_space<vmem>>, %arg3: memref<1x128xf32, #tpu.memory_space<vmem>>, %arg4: memref<128x128xf32, #tpu.memory_space<vmem>>, %arg5: memref<1x128xf32, #tpu.memory_space<vmem>>, %arg6: memref<8x128xf32, #tpu.memory_space<vmem>>) attributes {dimension_semantics = [#tpu.dimension_semantics<parallel>], iteration_bounds = array<i64: 1>, scalar_prefetch = 0 : i64, scratch_operands = 0 : i64, tpu.core_type = #tpu.core_type<tc>, window_params = [{transform_indices = @transform_0, window_bounds = array<i64: 8, 128>}, {pipeline_mode = #tpu.pipeline_mode<synchronous>, transform_indices = @transform_1, window_bounds = array<i64: 128, 128>}, {pipeline_mode = #tpu.pipeline_mode<synchronous>, transform_indices = @transform_2, window_bounds = array<i64: 1, 128>}, {pipeline_mode = #tpu.pipeline_mode<synchronous>, transform_indices = @transform_3, window_bounds = array<i64: 128, 128>}, {pipeline_mode = #tpu.pipeline_mode<synchronous>, transform_indices = @transform_4, window_bounds = array<i64: 1, 128>}, {transform_indices = @transform_5, window_bounds = array<i64: 8, 128>}]} {
    %c0 = arith.constant 0 : index
    %c0_0 = arith.constant 0 : index
    %0 = vector.load %arg1[%c0, %c0_0] : memref<8x128xf32, #tpu.memory_space<vmem>>, vector<8x128xf32>
    %c0_1 = arith.constant 0 : index
    %c0_2 = arith.constant 0 : index
    %1 = vector.load %arg2[%c0_1, %c0_2] : memref<128x128xf32, #tpu.memory_space<vmem>>, vector<128x128xf32>
    %cst = arith.constant dense<0.000000e+00> : vector<8x128xf32>
    %2 = tpu.matmul %0, %1, %cst {dimension_numbers = #tpu.dot_dimension_numbers<[1], [0], [0], [1], [0, 0, 1, 1], [], []>} : vector<8x128xf32>, vector<128x128xf32>, vector<8x128xf32> -> vector<8x128xf32>
    %c0_3 = arith.constant 0 : index
    %c0_4 = arith.constant 0 : index
    %3 = vector.load %arg3[%c0_3, %c0_4] : memref<1x128xf32, #tpu.memory_space<vmem>>, vector<1x128xf32>
    %4 = vector.broadcast %3 : vector<1x128xf32> to vector<8x128xf32>
    %5 = arith.addf %2, %4 : vector<8x128xf32>
    %6 = arith.negf %5 : vector<8x128xf32>
    %7 = math.exp %6 : vector<8x128xf32>
    %cst_5 = arith.constant 1.000000e+00 : f32
    %8 = vector.broadcast %cst_5 : f32 to vector<8x128xf32>
    %9 = arith.addf %8, %7 : vector<8x128xf32>
    %10 = arith.divf %8, %9 : vector<8x128xf32>
    %11 = arith.mulf %5, %10 : vector<8x128xf32>
    %c0_6 = arith.constant 0 : index
    %c0_7 = arith.constant 0 : index
    %12 = vector.load %arg4[%c0_6, %c0_7] : memref<128x128xf32, #tpu.memory_space<vmem>>, vector<128x128xf32>
    %cst_8 = arith.constant dense<0.000000e+00> : vector<8x128xf32>
    %13 = tpu.matmul %11, %12, %cst_8 {dimension_numbers = #tpu.dot_dimension_numbers<[1], [0], [0], [1], [0, 0, 1, 1], [], []>} : vector<8x128xf32>, vector<128x128xf32>, vector<8x128xf32> -> vector<8x128xf32>
    %c0_9 = arith.constant 0 : index
    %c0_10 = arith.constant 0 : index
    %14 = vector.load %arg5[%c0_9, %c0_10] : memref<1x128xf32, #tpu.memory_space<vmem>>, vector<1x128xf32>
    %15 = vector.broadcast %14 : vector<1x128xf32> to vector<8x128xf32>
    %16 = arith.addf %13, %15 : vector<8x128xf32>
    %17 = arith.negf %16 : vector<8x128xf32>
    %18 = math.exp %17 : vector<8x128xf32>
    %cst_11 = arith.constant 1.000000e+00 : f32
    %19 = vector.broadcast %cst_11 : f32 to vector<8x128xf32>
    %20 = arith.addf %19, %18 : vector<8x128xf32>
    %21 = arith.divf %19, %20 : vector<8x128xf32>
    %22 = arith.mulf %16, %21 : vector<8x128xf32>
    %c0_12 = arith.constant 0 : index
    %c0_13 = arith.constant 0 : index
    %23 = vector.load %arg1[%c0_12, %c0_13] : memref<8x128xf32, #tpu.memory_space<vmem>>, vector<8x128xf32>
    %24 = arith.addf %23, %22 : vector<8x128xf32>
    %c0_14 = arith.constant 0 : index
    %c0_15 = arith.constant 0 : index
    %25 = vector.load %arg6[%c0_14, %c0_15] : memref<8x128xf32, #tpu.memory_space<vmem>>, vector<8x128xf32>
    tpu.vector_store %arg6[%c0_14, %c0_15], %24 {strides = array<i32>} : memref<8x128xf32, #tpu.memory_space<vmem>>, vector<8x128xf32>,
    return
  }
  func.func @transform_0(%arg0: i32) -> (i32, i32) {
    %c0_i32 = arith.constant 0 : i32
    %c0_i32_0 = arith.constant 0 : i32
    return %arg0, %c0_i32 : i32, i32
  }
  func.func @transform_1(%arg0: i32) -> (i32, i32) {
    %c0_i32 = arith.constant 0 : i32
    %c0_i32_0 = arith.constant 0 : i32
    %c0_i32_1 = arith.constant 0 : i32
    return %c0_i32, %c0_i32_0 : i32, i32
  }
  func.func @transform_2(%arg0: i32) -> (i32, i32) {
    %c0_i32 = arith.constant 0 : i32
    %c0_i32_0 = arith.constant 0 : i32
    %c0_i32_1 = arith.constant 0 : i32
    return %c0_i32, %c0_i32_0 : i32, i32
  }
  func.func @transform_3(%arg0: i32) -> (i32, i32) {
    %c0_i32 = arith.constant 0 : i32
    %c0_i32_0 = arith.constant 0 : i32
    %c0_i32_1 = arith.constant 0 : i32
    return %c0_i32, %c0_i32_0 : i32, i32
  }
  func.func @transform_4(%arg0: i32) -> (i32, i32) {
    %c0_i32 = arith.constant 0 : i32
    %c0_i32_0 = arith.constant 0 : i32
    %c0_i32_1 = arith.constant 0 : i32
    return %c0_i32, %c0_i32_0 : i32, i32
  }
  func.func @transform_5(%arg0: i32) -> (i32, i32) {
    %c0_i32 = arith.constant 0 : i32
    %c0_i32_0 = arith.constant 0 : i32
    return %arg0, %c0_i32 : i32, i32
  }
}

</mosaic_0001>

<llo_original>
// kernel: residual_layer.1
$region0: #{residual_layer.1}
  #allocation0 [shape = 'u32[]', space=smem, size = 0x4, offset = 0x4, fixed_abs, tag = 'smem constant byte address 0x4 - core index']
  #allocation1 [shape = 'u32[144,128]{1,0:T(1,128)}', space=vmem, size = 0x12000, scoped, tag = 'internal scratch']
  %s0 = inlined_call_operand.vmem [shape: f32[8,128], index: 0, kind: input, shape index: {}, may-alias: {0,5}]
  %s1 = inlined_call_operand.hbm [shape: f32[128,128], index: 1, kind: input, shape index: {}]
  %s2 = inlined_call_operand.vmem [shape: f32[1,128], index: 2, kind: input, shape index: {}]
  %s3 = inlined_call_operand.hbm [shape: f32[128,128], index: 3, kind: input, shape index: {}]
  %s4 = inlined_call_operand.vmem [shape: f32[1,128], index: 4, kind: input, shape index: {}]
  %s5 = inlined_call_operand.vmem [shape: f32[8,128], index: 5, kind: output, shape index: {}, may-alias: {0,5}]
  %s6 = sld [smem:[#allocation0]]
  $region38: #{residual_layer.1} parent=0
    _
  %s8 = ssub.s32 1, %s6
  %s9 = scalar_select 0, %s8, %s6
  $region1: #{residual_layer.1} parent=0
    #allocation2 [shape = 'u8[65536]{0}', space=vmem, size = 0x10000, scoped, tag = 'input window, operand 1, single buffered']
    #allocation3 [shape = 's32[1]{0}', space=sflag, size = 0x4, scoped, tag = 'scoped memory for residual_layer.1']
    #allocation4 [shape = 'u8[65536]{0}', space=vmem, size = 0x10000, scoped, tag = 'input window, operand 3, single buffered']
    #allocation5 [shape = 's32[1]{0}', space=sflag, size = 0x4, scoped, tag = 'scoped memory for residual_layer.1']
    %10 = vsyncpa [#allocation3], 0
    %11 = vsyncpa [#allocation5], 0
    // Predicated region
    $region2: #{residual_layer.1} parent=1 // pred_check
      _
    $region3: #{residual_layer.1} parent=1 // pred_check_branch
      %13 = sbr.rel (0) target = $region5
    $region4: #{residual_layer.1} parent=1 // pred_region
      _
    $region5: #{residual_layer.1} parent=1 // pred_fallthru
      _
    // Predicated region
    $region6: #{residual_layer.1} parent=1 // pred_check
      _
    $region7: #{residual_layer.1} parent=1 // pred_check_branch
      %15 = sbr.rel (0) target = $region9
    $region8: #{residual_layer.1} parent=1 // pred_region
      %s17 = ssub.s32 2048, 2048
      %18 = vsyncadd [#allocation3], %s17
      %s19 = sshll.u32 [#allocation2], 4
      %s20 = int_to_ptr.vmem [resolvable:$true] %s19
      %25 = dma.hbm_to_vmem [thread:$0]  %s1, 2048, %s20, [#allocation3], 128, 128, 8
    $region9: #{residual_layer.1} parent=1 // pred_fallthru
      _
    // Predicated region
    $region10: #{residual_layer.1} parent=1 // pred_check
      _
    $region11: #{residual_layer.1} parent=1 // pred_check_branch
      %27 = sbr.rel (0) target = $region13
    $region12: #{residual_layer.1} parent=1 // pred_region
      _
    $region13: #{residual_layer.1} parent=1 // pred_fallthru
      _
    // Predicated region
    $region14: #{residual_layer.1} parent=1 // pred_check
      _
    $region15: #{residual_layer.1} parent=1 // pred_check_branch
      %29 = sbr.rel (0) target = $region17
    $region16: #{residual_layer.1} parent=1 // pred_region
      %s31 = ssub.s32 2048, 2048
      %32 = vsyncadd [#allocation5], %s31
      %s33 = sshll.u32 [#allocation4], 4
      %s34 = int_to_ptr.vmem [resolvable:$true] %s33
      %39 = dma.hbm_to_vmem [thread:$0]  %s3, 2048, %s34, [#allocation5], 128, 128, 8
    $region17: #{residual_layer.1} parent=1 // pred_fallthru
      _
    // Predicated region
    $region18: #{residual_layer.1} parent=1 // pred_check
      _
    $region19: #{residual_layer.1} parent=1 // pred_check_branch
      %41 = sbr.rel (0) target = $region21
    $region20: #{residual_layer.1} parent=1 // pred_region
      _
    $region21: #{residual_layer.1} parent=1 // pred_fallthru
      _
    // Predicated region
    $region22: #{residual_layer.1} parent=1 // pred_check
      _
    $region23: #{residual_layer.1} parent=1 // pred_check_branch
      %43 = sbr.rel (0) target = $region25
    $region24: #{residual_layer.1} parent=1 // pred_region
      %44 = dma.done [#allocation3], 2048
    $region25: #{residual_layer.1} parent=1 // pred_fallthru
      _
    // Predicated region
    $region26: #{residual_layer.1} parent=1 // pred_check
      _
    $region27: #{residual_layer.1} parent=1 // pred_check_branch
      %46 = sbr.rel (0) target = $region29
    $region28: #{residual_layer.1} parent=1 // pred_region
      %47 = dma.done [#allocation5], 2048
    $region29: #{residual_layer.1} parent=1 // pred_fallthru
      _
    %v48 = vld [vmem:[%s0] sm:$0xff]
    %v49 = vld [vmem:[#allocation2] sm:$0xff]
    %v50 = vld [vmem:[#allocation2 + $0x8] sm:$0xff]
    %v51 = vld [vmem:[#allocation2 + $0x10] sm:$0xff]
    %v52 = vld [vmem:[#allocation2 + $0x18] sm:$0xff]
    %v53 = vld [vmem:[#allocation2 + $0x20] sm:$0xff]
    %v54 = vld [vmem:[#allocation2 + $0x28] sm:$0xff]
    %v55 = vld [vmem:[#allocation2 + $0x30] sm:$0xff]
    %v56 = vld [vmem:[#allocation2 + $0x38] sm:$0xff]
    %v57 = vld [vmem:[#allocation2 + $0x40] sm:$0xff]
    %v58 = vld [vmem:[#allocation2 + $0x48] sm:$0xff]
    %v59 = vld [vmem:[#allocation2 + $0x50] sm:$0xff]
    %v60 = vld [vmem:[#allocation2 + $0x58] sm:$0xff]
    %v61 = vld [vmem:[#allocation2 + $0x60] sm:$0xff]
    %v62 = vld [vmem:[#allocation2 + $0x68] sm:$0xff]
    %v63 = vld [vmem:[#allocation2 + $0x70] sm:$0xff]
    %v64 = vld [vmem:[#allocation2 + $0x78] sm:$0xff]
    %v65 = vld [vmem:[%s2] sm:$0x1]
    %v67 = vlaneseq
    %v68 = vshrl.u32 %v67, 7
    %v69 = vsub.s32 0, %v68
    %v70 = vrot.slane %v65, %v69
    %72 = vmatprep.subr.mxu0 0.0
    %73 = vmatpush1.msra.mxu0 %v64
    %74 = vmatprep.subr.mxu0 0.0
    %75 = vmatpush1.msra.mxu0 %v63
    %76 = vmatprep.subr.mxu0 0.0
    %77 = vmatpush1.msra.mxu0 %v62
    %78 = vmatprep.subr.mxu0 0.0
    %79 = vmatpush1.msra.mxu0 %v61
    %80 = vmatprep.subr.mxu0 0.0
    %81 = vmatpush1.msra.mxu0 %v60
    %82 = vmatprep.subr.mxu0 0.0
    %83 = vmatpush1.msra.mxu0 %v59
    %84 = vmatprep.subr.mxu0 0.0
    %85 = vmatpush1.msra.mxu0 %v58
    %86 = vmatprep.subr.mxu0 0.0
    %87 = vmatpush1.msra.mxu0 %v57
    %88 = vmatprep.subr.mxu0 0.0
    %89 = vmatpush1.msra.mxu0 %v56
    %90 = vmatprep.subr.mxu0 0.0
    %91 = vmatpush1.msra.mxu0 %v55
    %92 = vmatprep.subr.mxu0 0.0
    %93 = vmatpush1.msra.mxu0 %v54
    %94 = vmatprep.subr.mxu0 0.0
    %95 = vmatpush1.msra.mxu0 %v53
    %96 = vmatprep.subr.mxu0 0.0
    %97 = vmatpush1.msra.mxu0 %v52
    %98 = vmatprep.subr.mxu0 0.0
    %99 = vmatpush1.msra.mxu0 %v51
    %100 = vmatprep.subr.mxu0 0.0
    %101 = vmatpush1.msra.mxu0 %v50
    %102 = vmatprep.subr.mxu0 0.0
    %103 = vmatpush1.msra.mxu0 %v49
    %104 = vmatprep.subr.mxu0 0.0
    %105 = vmatpush2.msra.mxu0 0.0
    %106 = vmatprep.subr.mxu0 0.0
    %107 = vmatpush2.msra.mxu0 0.0
    %108 = vmatprep.subr.mxu0 0.0
    %109 = vmatpush2.msra.mxu0 0.0
    %110 = vmatprep.subr.mxu0 0.0
    %111 = vmatpush2.msra.mxu0 0.0
    %112 = vmatprep.subr.mxu0 0.0
    %113 = vmatpush2.msra.mxu0 0.0
    %114 = vmatprep.subr.mxu0 0.0
    %115 = vmatpush2.msra.mxu0 0.0
    %116 = vmatprep.subr.mxu0 0.0
    %117 = vmatpush2.msra.mxu0 0.0
    %118 = vmatprep.subr.mxu0 0.0
    %119 = vmatpush2.msra.mxu0 0.0
    %120 = vmatprep.subr.mxu0 0.0
    %121 = vmatpush2.msra.mxu0 0.0
    %122 = vmatprep.subr.mxu0 0.0
    %123 = vmatpush2.msra.mxu0 0.0
    %124 = vmatprep.subr.mxu0 0.0
    %125 = vmatpush2.msra.mxu0 0.0
    %126 = vmatprep.subr.mxu0 0.0
    %127 = vmatpush2.msra.mxu0 0.0
    %128 = vmatprep.subr.mxu0 0.0
    %129 = vmatpush2.msra.mxu0 0.0
    %130 = vmatprep.subr.mxu0 0.0
    %131 = vmatpush2.msra.mxu0 0.0
    %132 = vmatprep.subr.mxu0 0.0
    %133 = vmatpush2.msra.mxu0 0.0
    %134 = vmatprep.subr.mxu0 0.0
    %135 = vmatpush2.msra.mxu0 0.0
    %136 = vmatprep.mubr.f32.mxu0 0.0
    %137 = vmatmul.mubr.f32.gmra.mxu0 %v48
    %v138 = vpop.f32.mrf.mxu0
    %v139 = vadd.f32 %v70, %v138
    %v140 = vpop.f32.mrf.mxu0
    %141 = vdwg.mxu0
    %v142 = vxor.u32 %v139, 2147483648
    %v143 = vmul.f32 %v142, 1.442695
    %v144 = vpow.pop %v143
    %v145 = vadd.f32 %v144, 1.0
    %v146 = vrcp.pop %v145
    %v147 = vmul.f32 1.0, %v146
    %v148 = vmul.f32 %v139, %v147
    %v149 = vld [vmem:[#allocation4] sm:$0xff]
    %v150 = vld [vmem:[#allocation4 + $0x8] sm:$0xff]
    %v151 = vld [vmem:[#allocation4 + $0x10] sm:$0xff]
    %v152 = vld [vmem:[#allocation4 + $0x18] sm:$0xff]
    %v153 = vld [vmem:[#allocation4 + $0x20] sm:$0xff]
    %v154 = vld [vmem:[#allocation4 + $0x28] sm:$0xff]
    %v155 = vld [vmem:[#allocation4 + $0x30] sm:$0xff]
    %v156 = vld [vmem:[#allocation4 + $0x38] sm:$0xff]
    %v157 = vld [vmem:[#allocation4 + $0x40] sm:$0xff]
    %v158 = vld [vmem:[#allocation4 + $0x48] sm:$0xff]
    %v159 = vld [vmem:[#allocation4 + $0x50] sm:$0xff]
    %v160 = vld [vmem:[#allocation4 + $0x58] sm:$0xff]
    %v161 = vld [vmem:[#allocation4 + $0x60] sm:$0xff]
    %v162 = vld [vmem:[#allocation4 + $0x68] sm:$0xff]
    %v163 = vld [vmem:[#allocation4 + $0x70] sm:$0xff]
    %v164 = vld [vmem:[#allocation4 + $0x78] sm:$0xff]
    %v165 = vld [vmem:[%s4] sm:$0x1]
    %v167 = vlaneseq
    %v168 = vshrl.u32 %v167, 7
    %v169 = vsub.s32 0, %v168
    %v170 = vrot.slane %v165, %v169
    %172 = vmatprep.subr.mxu0 0.0
    %173 = vmatpush1.msra.mxu0 %v164
    %174 = vmatprep.subr.mxu0 0.0
    %175 = vmatpush1.msra.mxu0 %v163
    %176 = vmatprep.subr.mxu0 0.0
    %177 = vmatpush1.msra.mxu0 %v162
    %178 = vmatprep.subr.mxu0 0.0
    %179 = vmatpush1.msra.mxu0 %v161
    %180 = vmatprep.subr.mxu0 0.0
    %181 = vmatpush1.msra.mxu0 %v160
    %182 = vmatprep.subr.mxu0 0.0
    %183 = vmatpush1.msra.mxu0 %v159
    %184 = vmatprep.subr.mxu0 0.0
    %185 = vmatpush1.msra.mxu0 %v158
    %186 = vmatprep.subr.mxu0 0.0
    %187 = vmatpush1.msra.mxu0 %v157
    %188 = vmatprep.subr.mxu0 0.0
    %189 = vmatpush1.msra.mxu0 %v156
    %190 = vmatprep.subr.mxu0 0.0
    %191 = vmatpush1.msra.mxu0 %v155
    %192 = vmatprep.subr.mxu0 0.0
    %193 = vmatpush1.msra.mxu0 %v154
    %194 = vmatprep.subr.mxu0 0.0
    %195 = vmatpush1.msra.mxu0 %v153
    %196 = vmatprep.subr.mxu0 0.0
    %197 = vmatpush1.msra.mxu0 %v152
    %198 = vmatprep.subr.mxu0 0.0
    %199 = vmatpush1.msra.mxu0 %v151
    %200 = vmatprep.subr.mxu0 0.0
    %201 = vmatpush1.msra.mxu0 %v150
    %202 = vmatprep.subr.mxu0 0.0
    %203 = vmatpush1.msra.mxu0 %v149
    %204 = vmatprep.subr.mxu0 0.0
    %205 = vmatpush2.msra.mxu0 0.0
    %206 = vmatprep.subr.mxu0 0.0
    %207 = vmatpush2.msra.mxu0 0.0
    %208 = vmatprep.subr.mxu0 0.0
    %209 = vmatpush2.msra.mxu0 0.0
    %210 = vmatprep.subr.mxu0 0.0
    %211 = vmatpush2.msra.mxu0 0.0
    %212 = vmatprep.subr.mxu0 0.0
    %213 = vmatpush2.msra.mxu0 0.0
    %214 = vmatprep.subr.mxu0 0.0
    %215 = vmatpush2.msra.mxu0 0.0
    %216 = vmatprep.subr.mxu0 0.0
    %217 = vmatpush2.msra.mxu0 0.0
    %218 = vmatprep.subr.mxu0 0.0
    %219 = vmatpush2.msra.mxu0 0.0
    %220 = vmatprep.subr.mxu0 0.0
    %221 = vmatpush2.msra.mxu0 0.0
    %222 = vmatprep.subr.mxu0 0.0
    %223 = vmatpush2.msra.mxu0 0.0
    %224 = vmatprep.subr.mxu0 0.0
    %225 = vmatpush2.msra.mxu0 0.0
    %226 = vmatprep.subr.mxu0 0.0
    %227 = vmatpush2.msra.mxu0 0.0
    %228 = vmatprep.subr.mxu0 0.0
    %229 = vmatpush2.msra.mxu0 0.0
    %230 = vmatprep.subr.mxu0 0.0
    %231 = vmatpush2.msra.mxu0 0.0
    %232 = vmatprep.subr.mxu0 0.0
    %233 = vmatpush2.msra.mxu0 0.0
    %234 = vmatprep.subr.mxu0 0.0
    %235 = vmatpush2.msra.mxu0 0.0
    %236 = vmatprep.mubr.f32.mxu0 0.0
    %237 = vmatmul.mubr.f32.gmra.mxu0 %v148
    %v238 = vpop.f32.mrf.mxu0
    %v239 = vadd.f32 %v170, %v238
    %v240 = vpop.f32.mrf.mxu0
    %241 = vdwg.mxu0
    %v242 = vxor.u32 %v239, 2147483648
    %v243 = vmul.f32 %v242, 1.442695
    %v244 = vpow.pop %v243
    %v245 = vadd.f32 %v244, 1.0
    %v246 = vrcp.pop %v245
    %v247 = vmul.f32 1.0, %v246
    %v248 = vmul.f32 %v239, %v247
    %v249 = vadd.f32 %v48, %v248
    %250 = vst [vmem:[%s5] sm:$0xff] %v249
    // Predicated region
    $region30: #{residual_layer.1} parent=1 // pred_check
      _
    $region31: #{residual_layer.1} parent=1 // pred_check_branch
      %252 = sbr.rel (0) target = $region33
    $region32: #{residual_layer.1} parent=1 // pred_region
      _
    $region33: #{residual_layer.1} parent=1 // pred_fallthru
      _
    // Predicated region
    $region34: #{residual_layer.1} parent=1 // pred_check
      _
    $region35: #{residual_layer.1} parent=1 // pred_check_branch
      %254 = sbr.rel (0) target = $region37
    $region36: #{residual_layer.1} parent=1 // pred_region
      _
    $region37: #{residual_layer.1} parent=1 // pred_fallthru
      _
    %255 = vsyncpa [#allocation3], 1
    %256 = vsyncpa [#allocation5], 1

</llo_original>
